<compile_context>
chip_gen: v7x
topology: tpu7x:2x2x1
jax: 0.10.0
libtpu: 0.0.40
codegen_flags: <defaults>
</compile_context>

<pallas_src>
import functools

import jax
import jax.numpy as jnp
from jax.experimental import pallas as pl
from jax.experimental.pallas import tpu as pltpu


def _round_up(x, m):
    return ((x + m - 1) // m) * m


def _cdiv(a, b):
    return (a + b - 1) // b


# ---------------------------------------------------------------------------
# Pallas kernels
# ---------------------------------------------------------------------------
def _matmul_bias_relu_kernel(a_ref, w_ref, bias_ref, o_ref):
    acc = jnp.dot(a_ref[...], w_ref[...], preferred_element_type=jnp.float32)
    o_ref[...] = jnp.maximum(acc + bias_ref[...], 0.0).astype(o_ref.dtype)


@functools.lru_cache(maxsize=None)
def _get_matmul_bias_relu(Mp, Kp, Np, TM):
    return pl.pallas_call(
        _matmul_bias_relu_kernel,
        out_shape=jax.ShapeDtypeStruct((Mp, Np), jnp.bfloat16),
        grid=(Mp // TM,),
        in_specs=[
            pl.BlockSpec((TM, Kp), lambda i: (i, 0)),
            pl.BlockSpec((Kp, Np), lambda i: (0, 0)),
            pl.BlockSpec((1, Np), lambda i: (0, 0)),
        ],
        out_specs=pl.BlockSpec((TM, Np), lambda i: (i, 0)),
        compiler_params=pltpu.CompilerParams(
            dimension_semantics=("parallel",),
        ),
    )


def _pick_tm(M, target=256):
    """Divisor-aware M tile (multiple of 16) to keep M padding small and the
    grid evenly splittable across TensorCores."""
    if M <= target:
        return _round_up(M, 16)
    n = _cdiv(M, target)
    return _round_up(_cdiv(M, n), 16)


def matmul_bias_relu(a, w, bias):
    """relu(a @ w + bias).  a:[M,Kp] bf16, w:[Kp,Np] bf16, bias:[1,Np] f32.
    Returns the row-padded [Mp, Np] bf16 result (caller slices M/OC)."""
    M, Kp = a.shape
    Np = w.shape[1]
    TM = _pick_tm(M)
    Mp = _round_up(M, TM)
    if Mp > M:
        a = jnp.pad(a, ((0, Mp - M), (0, 0)))
    return _get_matmul_bias_relu(Mp, Kp, Np, TM)(a, w, bias)


def _fc_log_softmax_kernel(x_ref, w_ref, b_ref, o_ref, *, num_classes):
    logits = jnp.dot(x_ref[...], w_ref[...], preferred_element_type=jnp.float32)
    logits = logits + b_ref[...]
    col = jax.lax.broadcasted_iota(jnp.int32, logits.shape, 1)
    valid = col < num_classes              # mask out padded class columns
    logits = jnp.where(valid, logits, -1e30)
    m = jnp.max(logits, axis=1, keepdims=True)
    e = jnp.where(valid, jnp.exp(logits - m), 0.0)
    lse = m + jnp.log(jnp.sum(e, axis=1, keepdims=True))
    o_ref[...] = logits - lse


@functools.lru_cache(maxsize=None)
def _get_fc_log_softmax(Mp, Kp, Np, num_classes):
    kernel = functools.partial(_fc_log_softmax_kernel, num_classes=num_classes)
    return pl.pallas_call(
        kernel,
        out_shape=jax.ShapeDtypeStruct((Mp, Np), jnp.float32),
        grid=(1,),
        in_specs=[
            pl.BlockSpec((Mp, Kp), lambda i: (0, 0)),
            pl.BlockSpec((Kp, Np), lambda i: (0, 0)),
            pl.BlockSpec((1, Np), lambda i: (0, 0)),
        ],
        out_specs=pl.BlockSpec((Mp, Np), lambda i: (0, 0)),
    )


def fc_log_softmax(x, w, b, num_classes):
    """log_softmax(x @ w + b, axis=1) fused in a single Pallas kernel (f32)."""
    M, K = x.shape
    N = w.shape[1]
    Mp = _round_up(M, 8)
    Kp = _round_up(K, 128)
    Np = _round_up(N, 128)
    x_p = jnp.pad(x, ((0, Mp - M), (0, Kp - K)))
    w_p = jnp.pad(w, ((0, Kp - K), (0, Np - N)))
    b_p = jnp.pad(b, ((0, Np - N),)).reshape(1, Np)
    return _get_fc_log_softmax(Mp, Kp, Np, num_classes)(x_p, w_p, b_p)[:M, :N]


# ---------------------------------------------------------------------------
# NHWC im2col + conv wrappers
# ---------------------------------------------------------------------------
def _im2col_nhwc(x, KH, KW, stride, padding, Kp):
    """NHWC im2col -> ([N*OH*OW, Kp] patch matrix, OH, OW).
    Column order is (kh, kw, c); zero K-padding is baked into the one concat."""
    N, H, W, C = x.shape
    sh, sw = stride
    ph, pw = padding
    OH = (H + 2 * ph - KH) // sh + 1
    OW = (W + 2 * pw - KW) // sw + 1
    K = KH * KW * C
    if KH == 1 and KW == 1 and sh == 1 and sw == 1:
        a = x.reshape(N * H * W, C)
        if Kp > C:
            a = jnp.concatenate(
                [a, jnp.zeros((N * H * W, Kp - C), x.dtype)], axis=1)
        return a, OH, OW
    xp = jnp.pad(x, ((0, 0), (ph, ph), (pw, pw), (0, 0))) if (ph or pw) else x
    cols = []
    for ki in range(KH):
        for kj in range(KW):
            cols.append(xp[:, ki:ki + sh * OH:sh, kj:kj + sw * OW:sw, :])
    if Kp > K:
        cols.append(jnp.zeros((N, OH, OW, Kp - K), x.dtype))
    a = jnp.concatenate(cols, axis=-1).reshape(N * OH * OW, Kp)
    return a, OH, OW


def basic_conv(x, p):
    """BasicConv2d: conv(no bias) + eval-mode BN (folded) + ReLU, NHWC in/out."""
    N = x.shape[0]
    a, OH, OW = _im2col_nhwc(x, p["KH"], p["KW"], p["stride"], p["padding"],
                             p["Kp"])
    out = matmul_bias_relu(a, p["w"], p["b"])
    M = N * OH * OW
    return out[:M, :p["OC"]].reshape(N, OH, OW, p["OC"])


def fused_conv1x1(x, p):
    """Several 1x1 BasicConv2d branches sharing the same input, fused into one
    lane-dense matmul; returns the per-branch outputs."""
    N, H, W, C = x.shape
    M = N * H * W
    a = x.reshape(M, C)
    if p["Kp"] > C:
        a = jnp.concatenate([a, jnp.zeros((M, p["Kp"] - C), x.dtype)], axis=1)
    out = matmul_bias_relu(a, p["w"], p["b"])[:M]
    outs, off = [], 0
    for oc in p["splits"]:
        outs.append(out[:, off:off + oc].reshape(N, H, W, oc))
        off += oc
    return outs


# TODO(synk): pooling layers use lax.reduce_window glue (negligible FLOPs)
# rather than dedicated Pallas kernels.
def max_pool_3x3_s2(x):
    return jax.lax.reduce_window(
        x, jnp.array(-jnp.inf, x.dtype), jax.lax.max,
        (1, 3, 3, 1), (1, 2, 2, 1), "VALID")


def avg_pool_3x3_s1_p1(x):
    # matches F.avg_pool2d(x, 3, stride=1, padding=1), count_include_pad=True
    s = jax.lax.reduce_window(
        x.astype(jnp.float32), jnp.array(0.0, jnp.float32), jax.lax.add,
        (1, 3, 3, 1), (1, 1, 1, 1), ((0, 0), (1, 1), (1, 1), (0, 0)))
    return (s * (1.0 / 9.0)).astype(x.dtype)


# ---------------------------------------------------------------------------
# Deterministic synthetic parameters (structure of torchvision inception_v3),
# pre-packed into MXU-ready (Kp, Np) bf16 operands.
# ---------------------------------------------------------------------------
class ParamGen:
    def __init__(self, key):
        self._key = key
        self._i = 0

    def _next(self):
        self._i += 1
        return jax.random.fold_in(self._key, self._i)

    def conv_bn(self, cin, cout, kh, kw):
        fan_in = cin * kh * kw
        w = jax.random.normal(self._next(), (cout, cin, kh, kw), jnp.float32)
        w = w * jnp.sqrt(2.0 / fan_in)
        # fold eval-mode BN (gamma=1, beta=0, running mean=0, var=1, eps=1e-3)
        w = w * (1.0 / jnp.sqrt(1.0 + 1e-3))
        b = jnp.zeros((cout,), jnp.float32)
        return w, b

    def linear(self, cin, cout):
        w = jax.random.normal(self._next(), (cin, cout), jnp.float32)
        w = w * (1.0 / jnp.sqrt(cin))
        b = 0.01 * jax.random.normal(self._next(), (cout,), jnp.float32)
        return w, b


def prep_conv(wb, stride=(1, 1), padding=(0, 0)):
    """Pre-transpose / pre-pad a conv weight into the (Kp, Np) bf16 matmul
    operand once, outside the forward pass (B DMA is a straight copy)."""
    w, b = wb
    OC, C, KH, KW = w.shape
    K = KH * KW * C
    Kp = _round_up(K, 128)
    Np = _round_up(OC, 128)
    wmat = w.transpose(2, 3, 1, 0).reshape(K, OC)        # (kh, kw, c) x OC
    wmat = jnp.pad(wmat, ((0, Kp - K), (0, Np - OC))).astype(jnp.bfloat16)
    bias = jnp.pad(b, ((0, Np - OC),)).reshape(1, Np).astype(jnp.float32)
    return dict(w=wmat, b=bias, KH=KH, KW=KW, OC=OC, Kp=Kp, Np=Np,
                stride=stride, padding=padding)


def prep_fused_1x1(wbs):
    """Concatenate several same-input 1x1 conv weights along OC into one wide,
    lane-dense matmul operand."""
    C = wbs[0][0].shape[1]
    splits = [w.shape[0] for w, _ in wbs]
    wcat = jnp.concatenate([w.reshape(w.shape[0], C).T for w, _ in wbs], axis=1)
    bcat = jnp.concatenate([b for _, b in wbs])
    OC = wcat.shape[1]
    Kp = _round_up(C, 128)
    Np = _round_up(OC, 128)
    wmat = jnp.pad(wcat, ((0, Kp - C), (0, Np - OC))).astype(jnp.bfloat16)
    bias = jnp.pad(bcat, ((0, Np - OC),)).reshape(1, Np).astype(jnp.float32)
    return dict(w=wmat, b=bias, Kp=Kp, Np=Np, splits=splits)


def make_a(pg, cin, pool_features):
    return dict(
        fused=prep_fused_1x1([pg.conv_bn(cin, 64, 1, 1),     # b1x1
                              pg.conv_bn(cin, 48, 1, 1),     # b5_1
                              pg.conv_bn(cin, 64, 1, 1)]),   # bd_1
        b5_2=prep_conv(pg.conv_bn(48, 64, 5, 5), padding=(2, 2)),
        bd_2=prep_conv(pg.conv_bn(64, 96, 3, 3), padding=(1, 1)),
        bd_3=prep_conv(pg.conv_bn(96, 96, 3, 3), padding=(1, 1)),
        bpool=prep_conv(pg.conv_bn(cin, pool_features, 1, 1)))


def run_a(p, x):
    b1, b5, bd = fused_conv1x1(x, p["fused"])
    b5 = basic_conv(b5, p["b5_2"])
    bd = basic_conv(basic_conv(bd, p["bd_2"]), p["bd_3"])
    bp = basic_conv(avg_pool_3x3_s1_p1(x), p["bpool"])
    return jnp.concatenate([b1, b5, bd, bp], axis=-1)


def make_b(pg, cin):
    return dict(
        b3=prep_conv(pg.conv_bn(cin, 384, 3, 3), stride=(2, 2)),
        bd_1=prep_conv(pg.conv_bn(cin, 64, 1, 1)),
        bd_2=prep_conv(pg.conv_bn(64, 96, 3, 3), padding=(1, 1)),
        bd_3=prep_conv(pg.conv_bn(96, 96, 3, 3), stride=(2, 2)))


def run_b(p, x):
    b3 = basic_conv(x, p["b3"])
    bd = basic_conv(basic_conv(basic_conv(x, p["bd_1"]), p["bd_2"]), p["bd_3"])
    bp = max_pool_3x3_s2(x)
    return jnp.concatenate([b3, bd, bp], axis=-1)


def make_c(pg, cin, c7):
    return dict(
        fused=prep_fused_1x1([pg.conv_bn(cin, 192, 1, 1),    # b1x1
                              pg.conv_bn(cin, c7, 1, 1),     # b7_1
                              pg.conv_bn(cin, c7, 1, 1)]),   # bd_1
        b7_2=prep_conv(pg.conv_bn(c7, c7, 1, 7), padding=(0, 3)),
        b7_3=prep_conv(pg.conv_bn(c7, 192, 7, 1), padding=(3, 0)),
        bd_2=prep_conv(pg.conv_bn(c7, c7, 7, 1), padding=(3, 0)),
        bd_3=prep_conv(pg.conv_bn(c7, c7, 1, 7), padding=(0, 3)),
        bd_4=prep_conv(pg.conv_bn(c7, c7, 7, 1), padding=(3, 0)),
        bd_5=prep_conv(pg.conv_bn(c7, 192, 1, 7), padding=(0, 3)),
        bpool=prep_conv(pg.conv_bn(cin, 192, 1, 1)))


def run_c(p, x):
    b1, b7, bd = fused_conv1x1(x, p["fused"])
    b7 = basic_conv(basic_conv(b7, p["b7_2"]), p["b7_3"])
    bd = basic_conv(bd, p["bd_2"])
    bd = basic_conv(bd, p["bd_3"])
    bd = basic_conv(bd, p["bd_4"])
    bd = basic_conv(bd, p["bd_5"])
    bp = basic_conv(avg_pool_3x3_s1_p1(x), p["bpool"])
    return jnp.concatenate([b1, b7, bd, bp], axis=-1)


def make_d(pg, cin):
    return dict(
        fused=prep_fused_1x1([pg.conv_bn(cin, 192, 1, 1),    # b3_1
                              pg.conv_bn(cin, 192, 1, 1)]),  # b7_1
        b3_2=prep_conv(pg.conv_bn(192, 320, 3, 3), stride=(2, 2)),
        b7_2=prep_conv(pg.conv_bn(192, 192, 1, 7), padding=(0, 3)),
        b7_3=prep_conv(pg.conv_bn(192, 192, 7, 1), padding=(3, 0)),
        b7_4=prep_conv(pg.conv_bn(192, 192, 3, 3), stride=(2, 2)))


def run_d(p, x):
    b3, b7 = fused_conv1x1(x, p["fused"])
    b3 = basic_conv(b3, p["b3_2"])
    b7 = basic_conv(basic_conv(basic_conv(b7, p["b7_2"]), p["b7_3"]), p["b7_4"])
    bp = max_pool_3x3_s2(x)
    return jnp.concatenate([b3, b7, bp], axis=-1)


def make_e(pg, cin):
    return dict(
        fused=prep_fused_1x1([pg.conv_bn(cin, 320, 1, 1),    # b1x1
                              pg.conv_bn(cin, 384, 1, 1),    # b3_1
                              pg.conv_bn(cin, 448, 1, 1)]),  # bd_1
        b3_2a=prep_conv(pg.conv_bn(384, 384, 1, 3), padding=(0, 1)),
        b3_2b=prep_conv(pg.conv_bn(384, 384, 3, 1), padding=(1, 0)),
        bd_2=prep_conv(pg.conv_bn(448, 384, 3, 3), padding=(1, 1)),
        bd_3a=prep_conv(pg.conv_bn(384, 384, 1, 3), padding=(0, 1)),
        bd_3b=prep_conv(pg.conv_bn(384, 384, 3, 1), padding=(1, 0)),
        bpool=prep_conv(pg.conv_bn(cin, 192, 1, 1)))


def run_e(p, x):
    b1, b3, bd = fused_conv1x1(x, p["fused"])
    b3 = jnp.concatenate([basic_conv(b3, p["b3_2a"]),
                          basic_conv(b3, p["b3_2b"])], axis=-1)
    bd = basic_conv(bd, p["bd_2"])
    bd = jnp.concatenate([basic_conv(bd, p["bd_3a"]),
                          basic_conv(bd, p["bd_3b"])], axis=-1)
    bp = basic_conv(avg_pool_3x3_s1_p1(x), p["bpool"])
    return jnp.concatenate([b1, b3, bd, bp], axis=-1)


def make_params(pg, num_classes):
    p = {}
    p["c1a"] = prep_conv(pg.conv_bn(3, 32, 3, 3), stride=(2, 2))
    p["c2a"] = prep_conv(pg.conv_bn(32, 32, 3, 3))
    p["c2b"] = prep_conv(pg.conv_bn(32, 64, 3, 3), padding=(1, 1))
    p["c3b"] = prep_conv(pg.conv_bn(64, 80, 1, 1))
    p["c4a"] = prep_conv(pg.conv_bn(80, 192, 3, 3))
    p["m5b"] = make_a(pg, 192, 32)
    p["m5c"] = make_a(pg, 256, 64)
    p["m5d"] = make_a(pg, 288, 64)
    p["m6a"] = make_b(pg, 288)
    p["m6b"] = make_c(pg, 768, 128)
    p["m6c"] = make_c(pg, 768, 160)
    p["m6d"] = make_c(pg, 768, 160)
    p["m6e"] = make_c(pg, 768, 192)
    p["m7a"] = make_d(pg, 768)
    p["m7b"] = make_e(pg, 1280)
    p["m7c"] = make_e(pg, 2048)
    p["fc_w"], p["fc_b"] = pg.linear(2048, num_classes)
    return p


def audio_model_forward(params, x, num_classes):
    # torchvision Inception3 (aux_logits=False, transform_input=False), eval.
    x = jnp.transpose(x, (0, 2, 3, 1)).astype(jnp.bfloat16)   # NCHW -> NHWC once
    x = basic_conv(x, params["c1a"])
    x = basic_conv(x, params["c2a"])
    x = basic_conv(x, params["c2b"])
    x = max_pool_3x3_s2(x)
    x = basic_conv(x, params["c3b"])
    x = basic_conv(x, params["c4a"])
    x = max_pool_3x3_s2(x)
    x = run_a(params["m5b"], x)
    x = run_a(params["m5c"], x)
    x = run_a(params["m5d"], x)
    x = run_b(params["m6a"], x)
    x = run_c(params["m6b"], x)
    x = run_c(params["m6c"], x)
    x = run_c(params["m6d"], x)
    x = run_c(params["m6e"], x)
    x = run_d(params["m7a"], x)
    x = run_e(params["m7b"], x)
    x = run_e(params["m7c"], x)
    x = jnp.mean(x.astype(jnp.float32), axis=(1, 2))  # AdaptiveAvgPool2d(1)+flatten
    # Dropout(p=0.5) is identity in eval mode.
    return fc_log_softmax(x, params["fc_w"], params["fc_b"], num_classes)


if __name__ == "__main__":
    num_classes = 10
    key = jax.random.PRNGKey(0)
    pg = ParamGen(key)
    params = make_params(pg, num_classes)

    # 75x75 is the smallest spatial size that survives the Inception-v3 stem.
    x = jax.random.normal(jax.random.fold_in(key, 10_000),
                          (2, 3, 75, 75), jnp.float32)

    out = audio_model_forward(params, x, num_classes)
    out = jax.block_until_ready(out)

    assert out.shape == (2, num_classes), out.shape
    assert bool(jnp.all(jnp.isfinite(out)))
    probs_sum = jnp.sum(jnp.exp(out), axis=1)      # log_softmax rows -> probs sum to 1
    assert bool(jnp.all(jnp.abs(probs_sum - 1.0) < 1e-3)), probs_sum
    print("KERNEL_OK")
</pallas_src>

<mosaic_0001>
module attributes {stable_mosaic.version = 11 : i64} {
  func.func @_matmul_bias_relu_kernel(%arg0: i32, %arg1: memref<256x128xbf16, #tpu.memory_space<vmem>>, %arg2: memref<128x128xbf16, #tpu.memory_space<vmem>>, %arg3: memref<1x128xf32, #tpu.memory_space<vmem>>, %arg4: memref<256x128xbf16, #tpu.memory_space<vmem>>) attributes {dimension_semantics = [#tpu.dimension_semantics<parallel>], iteration_bounds = array<i64: 11>, scalar_prefetch = 0 : i64, scratch_operands = 0 : i64, tpu.core_type = #tpu.core_type<tc>, window_params = [{transform_indices = @transform_0, window_bounds = array<i64: 256, 128>}, {pipeline_mode = #tpu.pipeline_mode<synchronous>, transform_indices = @transform_1, window_bounds = array<i64: 128, 128>}, {pipeline_mode = #tpu.pipeline_mode<synchronous>, transform_indices = @transform_2, window_bounds = array<i64: 1, 128>}, {transform_indices = @transform_3, window_bounds = array<i64: 256, 128>}]} {
    %c0 = arith.constant 0 : index
    %c0_0 = arith.constant 0 : index
    %0 = vector.load %arg1[%c0, %c0_0] : memref<256x128xbf16, #tpu.memory_space<vmem>>, vector<256x128xbf16>
    %c0_1 = arith.constant 0 : index
    %c0_2 = arith.constant 0 : index
    %1 = vector.load %arg2[%c0_1, %c0_2] : memref<128x128xbf16, #tpu.memory_space<vmem>>, vector<128x128xbf16>
    %cst = arith.constant dense<0.000000e+00> : vector<256x128xf32>
    %2 = tpu.matmul %0, %1, %cst {dimension_numbers = #tpu.dot_dimension_numbers<[1], [0], [0], [1], [0, 0, 1, 1], [], []>} : vector<256x128xbf16>, vector<128x128xbf16>, vector<256x128xf32> -> vector<256x128xf32>
    %c0_3 = arith.constant 0 : index
    %c0_4 = arith.constant 0 : index
    %3 = vector.load %arg3[%c0_3, %c0_4] : memref<1x128xf32, #tpu.memory_space<vmem>>, vector<1x128xf32>
    %4 = vector.broadcast %3 : vector<1x128xf32> to vector<256x128xf32>
    %5 = arith.addf %2, %4 : vector<256x128xf32>
    %cst_5 = arith.constant 0.000000e+00 : f32
    %6 = vector.broadcast %cst_5 : f32 to vector<256x128xf32>
    %7 = arith.maximumf %5, %6 : vector<256x128xf32>
    %8 = arith.truncf %7 : vector<256x128xf32> to vector<256x128xbf16>
    %c0_6 = arith.constant 0 : index
    %c0_7 = arith.constant 0 : index
    %9 = vector.load %arg4[%c0_6, %c0_7] : memref<256x128xbf16, #tpu.memory_space<vmem>>, vector<256x128xbf16>
    tpu.vector_store %arg4[%c0_6, %c0_7], %8 {strides = array<i32>} : memref<256x128xbf16, #tpu.memory_space<vmem>>, vector<256x128xbf16>,
    return
  }
  func.func @transform_0(%arg0: i32) -> (i32, i32) {
    %c0_i32 = arith.constant 0 : i32
    %c0_i32_0 = arith.constant 0 : i32
    return %arg0, %c0_i32 : i32, i32
  }
  func.func @transform_1(%arg0: i32) -> (i32, i32) {
    %c0_i32 = arith.constant 0 : i32
    %c0_i32_0 = arith.constant 0 : i32
    %c0_i32_1 = arith.constant 0 : i32
    return %c0_i32, %c0_i32_0 : i32, i32
  }
  func.func @transform_2(%arg0: i32) -> (i32, i32) {
    %c0_i32 = arith.constant 0 : i32
    %c0_i32_0 = arith.constant 0 : i32
    %c0_i32_1 = arith.constant 0 : i32
    return %c0_i32, %c0_i32_0 : i32, i32
  }
  func.func @transform_3(%arg0: i32) -> (i32, i32) {
    %c0_i32 = arith.constant 0 : i32
    %c0_i32_0 = arith.constant 0 : i32
    return %arg0, %c0_i32 : i32, i32
  }
}

</mosaic_0001>

<llo_original>
// kernel: tpu_custom_call.1
$region0: #{tpu_custom_call.1}
  #allocation0 [shape = 'u32[]', space=smem, size = 0x4, offset = 0x4, fixed_abs, tag = 'smem constant byte address 0x4 - core index']
  #allocation1 [shape = 'u32[144,128]{1,0:T(1,128)}', space=vmem, size = 0x12000, scoped, tag = 'internal scratch']
  %s0 = inlined_call_operand.hbm [shape: bf16[2816,128], index: 0, kind: input, shape index: {}]
  %s1 = inlined_call_operand.hbm [shape: bf16[128,128], index: 1, kind: input, shape index: {}]
  %s2 = inlined_call_operand.vmem [shape: f32[1,128], index: 2, kind: input, shape index: {}]
  %s3 = inlined_call_operand.hbm [shape: bf16[2816,128], index: 3, kind: output, shape index: {}]
  %s4 = sld [smem:[#allocation0]]
  $region53: #{tpu_custom_call.1} parent=0
    _
  %s6 = ssub.s32 1, %s4
  %s7 = scalar_select 0, %s6, %s4
  $region1: #{tpu_custom_call.1} parent=0
    #allocation2 [shape = 'u8[131072]{0}', space=vmem, size = 0x20000, scoped, tag = 'input window, operand 0']
    #allocation3 [shape = 's32[2]{0}', space=sflag, size = 0x8, scoped, tag = 'scoped memory for tpu_custom_call.1']
    #allocation4 [shape = 's32[2]{0}', space=sflag, size = 0x8, scoped, tag = 'scoped memory for tpu_custom_call.1']
    #allocation5 [shape = 'u8[32768]{0}', space=vmem, size = 0x8000, scoped, tag = 'input window, operand 1, single buffered']
    #allocation6 [shape = 's32[1]{0}', space=sflag, size = 0x4, scoped, tag = 'scoped memory for tpu_custom_call.1']
    #allocation7 [shape = 'u8[131072]{0}', space=vmem, size = 0x20000, scoped, tag = 'output window, operand 0']
    %8 = vsyncpa [#allocation3], 0
    %s9 = scalar_lea.sflag [#allocation3], 1
    %10 = vsyncpa %s9, 0
    %11 = vsyncpa [#allocation6], 0
    %12 = vsyncpa [#allocation4], 0
    %s13 = scalar_lea.sflag [#allocation4], 1
    %14 = vsyncpa %s13, 0
    loop: start=0, step=1, limit=13
    $region2: #{tpu_custom_call.1} parent=1 // loop_pre_header
      _
    $region3: #{tpu_custom_call.1} parent=1 // loop_header
      %s16 = sphi 0, %s20
      %p17 = scmp.ge.s32.totalorder %s16, 13
      %s26 = sphi 0, %s28
      %s29 = sphi 0, %s26
      %s30 = sphi 0, %s29
      %s46 = sphi 0, %s30
      %s50 = sphi 0, %s50
      %s52 = sphi 0, %s50
      %s53 = sphi 0, %s52
      %s67 = sphi 0, %s53
      %s71 = sphi 0, %s71
      %s73 = sphi 0, %s71
      %s74 = sphi 0, %s73
      %s88 = sphi 0, %s74
      %s94 = sphi 0, %s96
      %s97 = sphi 0, %s94
      %s98 = sphi 0, %s97
      %s114 = sphi 0, %s98
    $region4: #{tpu_custom_call.1} parent=1 // loop_header_branch
      %19 = sbr.rel (%p17) target = $region8
    $region5: #{tpu_custom_call.1} parent=1 // loop_body
      %s21 = ssub.s32 %s16, 1
      %s22 = ssub.s32 %s16, 2
      %s23 = sadd.s32 %s16, 1
      %s24 = ssub.s32 %s16, %s23
      %p25 = scmp.eq.s32.totalorder %s24, 0
      %s27 = sadd.s32 %s26, 1
      %s28 = scalar_select %p25, %s26, %s27
      %p31 = pneg %p25
      %p32 = scmp.eq.s32.totalorder %s16, 10
      %p33 = por %p31, %p32
      %p34 = scmp.ne.s32.totalorder %s26, %s29
      %p35 = scmp.eq.s32.totalorder %s16, 0
      %p36 = por %p34, %p35
      %p37 = scmp.ne.s32.totalorder %s26, %s29
      %p38 = scmp.eq.s32.totalorder %s21, 10
      %p39 = por %p37, %p38
      %p40 = scmp.ne.s32.totalorder %s29, %s30
      %p41 = scmp.eq.s32.totalorder %s21, 0
      %p42 = por %p40, %p41
      %p43 = scmp.ne.s32.totalorder %s29, %s30
      %p44 = scmp.eq.s32.totalorder %s22, 10
      %p45 = por %p43, %p44
      %p47 = scmp.ne.s32.totalorder %s30, %s46
      %p48 = scmp.eq.s32.totalorder %s22, 0
      %p49 = por %p47, %p48
      %s51 = sadd.s32 %s50, 1
      %p54 = scmp.eq.s32.totalorder %s16, 10
      %p55 = scmp.ne.s32.totalorder %s50, %s52
      %p56 = scmp.eq.s32.totalorder %s16, 0
      %p57 = por %p55, %p56
      %p58 = scmp.ne.s32.totalorder %s50, %s52
      %p59 = scmp.eq.s32.totalorder %s21, 10
      %p60 = por %p58, %p59
      %p61 = scmp.ne.s32.totalorder %s52, %s53
      %p62 = scmp.eq.s32.totalorder %s21, 0
      %p63 = por %p61, %p62
      %p64 = scmp.ne.s32.totalorder %s52, %s53
      %p65 = scmp.eq.s32.totalorder %s22, 10
      %p66 = por %p64, %p65
      %p68 = scmp.ne.s32.totalorder %s53, %s67
      %p69 = scmp.eq.s32.totalorder %s22, 0
      %p70 = por %p68, %p69
      %s72 = sadd.s32 %s71, 1
      %p75 = scmp.eq.s32.totalorder %s16, 10
      %p76 = scmp.ne.s32.totalorder %s71, %s73
      %p77 = scmp.eq.s32.totalorder %s16, 0
      %p78 = por %p76, %p77
      %p79 = scmp.ne.s32.totalorder %s71, %s73
      %p80 = scmp.eq.s32.totalorder %s21, 10
      %p81 = por %p79, %p80
      %p82 = scmp.ne.s32.totalorder %s73, %s74
      %p83 = scmp.eq.s32.totalorder %s21, 0
      %p84 = por %p82, %p83
      %p85 = scmp.ne.s32.totalorder %s73, %s74
      %p86 = scmp.eq.s32.totalorder %s22, 10
      %p87 = por %p85, %p86
      %p89 = scmp.ne.s32.totalorder %s74, %s88
      %p90 = scmp.eq.s32.totalorder %s22, 0
      %p91 = por %p89, %p90
      %s92 = ssub.s32 %s16, %s23
      %p93 = scmp.eq.s32.totalorder %s92, 0
      %s95 = sadd.s32 %s94, 1
      %s96 = scalar_select %p93, %s94, %s95
      %p99 = pneg %p93
      %p100 = scmp.eq.s32.totalorder %s16, 10
      %p101 = por %p99, %p100
      %p102 = scmp.ne.s32.totalorder %s94, %s97
      %p103 = scmp.eq.s32.totalorder %s16, 0
      %p104 = por %p102, %p103
      %p105 = scmp.ne.s32.totalorder %s94, %s97
      %p106 = scmp.eq.s32.totalorder %s21, 10
      %p107 = por %p105, %p106
      %p108 = scmp.ne.s32.totalorder %s97, %s98
      %p109 = scmp.eq.s32.totalorder %s21, 0
      %p110 = por %p108, %p109
      %p111 = scmp.ne.s32.totalorder %s97, %s98
      %p112 = scmp.eq.s32.totalorder %s22, 10
      %p113 = por %p111, %p112
      %p115 = scmp.ne.s32.totalorder %s98, %s114
      %p116 = scmp.eq.s32.totalorder %s22, 0
      %p117 = por %p115, %p116
      %p118 = scmp.le.s32.totalorder 1, %s16
      %p119 = scmp.lt.s32.totalorder %s16, 12
      %p120 = pnand %p118, %p119
      %p121 = pneg %p120
      // Predicated region
      $region9: #{tpu_custom_call.1} parent=5 // pred_check
        _
      $region10: #{tpu_custom_call.1} parent=5 // pred_check_branch
        %123 = sbr.rel (%p120) target = $region12
      $region11: #{tpu_custom_call.1} parent=5 // pred_region
        %s124 = ssub.s32 %s16, 1
        // Predicated region
        $region13: #{tpu_custom_call.1} parent=11 // pred_check
          %p125 = pneg %p63
        $region14: #{tpu_custom_call.1} parent=11 // pred_check_branch
          %127 = sbr.rel (%p125) target = $region16
        $region15: #{tpu_custom_call.1} parent=11 // pred_region
          %s129 = ssub.s32 1024, 1024
          %130 = vsyncadd [#allocation6], %s129
          %s131 = sshll.u32 [#allocation5], 4
          %s132 = int_to_ptr.vmem [resolvable:$true] %s131
          %137 = dma.hbm_to_vmem [thread:$0]  %s1, 1024, %s132, [#allocation6], 64, 64, 4
        $region16: #{tpu_custom_call.1} parent=11 // pred_fallthru
          _
        // Predicated region
        $region17: #{tpu_custom_call.1} parent=11 // pred_check
          %p138 = pneg %p84
        $region18: #{tpu_custom_call.1} parent=11 // pred_check_branch
          %140 = sbr.rel (%p138) target = $region20
        $region19: #{tpu_custom_call.1} parent=11 // pred_region
          _
        $region20: #{tpu_custom_call.1} parent=11 // pred_fallthru
          _
      $region12: #{tpu_custom_call.1} parent=5 // pred_fallthru
        _
      %p141 = scmp.lt.s32.totalorder %s16, 11
      // Predicated region
      $region21: #{tpu_custom_call.1} parent=5 // pred_check
        %p142 = pneg %p141
      $region22: #{tpu_custom_call.1} parent=5 // pred_check_branch
        %144 = sbr.rel (%p142) target = $region24
      $region23: #{tpu_custom_call.1} parent=5 // pred_region
        // Predicated region
        $region25: #{tpu_custom_call.1} parent=23 // pred_check
          %p145 = pneg %p36
        $region26: #{tpu_custom_call.1} parent=23 // pred_check_branch
          %147 = sbr.rel (%p145) target = $region28
        $region27: #{tpu_custom_call.1} parent=23 // pred_region
          %s148 = sand.u32 %s26, 1
          %s149 = scalar_lea.sflag [#allocation3], %s148
          %s150 = sand.u32 %s26, 1
          %s151 = smul.addr %s150, 128
          %s152 = scalar_lea.vmem [#allocation2], %s151
          %s153 = smul.u32 32, %s16
          %s155 = ssub.s32 2048, 2048
          %156 = vsyncadd %s149, %s155
          %s157 = smul.addr %s153, 64
          %s158 = scalar_lea.hbm %s0, %s157
          %s159 = sshll.u32 %s152, 4
          %s160 = int_to_ptr.vmem [resolvable:$true] %s159
          %165 = dma.hbm_to_vmem [thread:$0]  %s158, 2048, %s160, %s149, 64, 64, 4
        $region28: #{tpu_custom_call.1} parent=23 // pred_fallthru
          _
      $region24: #{tpu_custom_call.1} parent=5 // pred_fallthru
        _
      %p166 = scmp.le.s32.totalorder 1, %s16
      %p167 = scmp.lt.s32.totalorder %s16, 12
      %p168 = pnand %p166, %p167
      %p169 = pneg %p168
      // Predicated region
      $region29: #{tpu_custom_call.1} parent=5 // pred_check
        _
      $region30: #{tpu_custom_call.1} parent=5 // pred_check_branch
        %171 = sbr.rel (%p168) target = $region32
      $region31: #{tpu_custom_call.1} parent=5 // pred_region
        %s172 = ssub.s32 %s16, 1
        %s173 = sand.u32 %s29, 1
        %s174 = scalar_lea.sflag [#allocation3], %s173
        %s175 = sand.u32 %s29, 1
        %s176 = smul.addr %s175, 128
        %s177 = scalar_lea.vmem [#allocation2], %s176
        // Predicated region
        $region33: #{tpu_custom_call.1} parent=31 // pred_check
          %p178 = pneg %p42
        $region34: #{tpu_custom_call.1} parent=31 // pred_check_branch
          %180 = sbr.rel (%p178) target = $region36
        $region35: #{tpu_custom_call.1} parent=31 // pred_region
          %181 = dma.done %s174, 2048
        $region36: #{tpu_custom_call.1} parent=31 // pred_fallthru
          _
        // Predicated region
        $region37: #{tpu_custom_call.1} parent=31 // pred_check
          %p182 = pneg %p63
        $region38: #{tpu_custom_call.1} parent=31 // pred_check_branch
          %184 = sbr.rel (%p182) target = $region40
        $region39: #{tpu_custom_call.1} parent=31 // pred_region
          %185 = dma.done [#allocation6], 1024
        $region40: #{tpu_custom_call.1} parent=31 // pred_fallthru
          _
        %s186 = sand.u32 %s29, 1
        %s187 = scalar_lea.sflag [#allocation3], %s186
        %s188 = sand.u32 %s29, 1
        %s189 = smul.addr %s188, 128
        %s190 = scalar_lea.vmem [#allocation2], %s189
        %p191 = pneg %p42
        %p192 = pneg %p39
        %p193 = pneg %p63
        %p194 = pneg %p60
        %p195 = pneg %p84
        %p196 = pneg %p81
        %p197 = pneg %p110
        %p198 = pneg %p107
        %s199 = sand.u32 %s97, 1
        %s200 = scalar_lea.sflag [#allocation4], %s199
        %s201 = sand.u32 %s97, 1
        %s202 = smul.addr %s201, 128
        %s203 = scalar_lea.vmem [#allocation7], %s202
        %s204 = smul.u32 32, %s21
        %s205 = smul.u32 32, %s21
        %v207 = vld [vmem:[%s177] sm:$0xf]
        %v208 = vld [vmem:[%s177 + $0x4] sm:$0xf]
        %v209 = vld [vmem:[%s177 + $0x8] sm:$0xf]
        %v210 = vld [vmem:[%s177 + $0xc] sm:$0xf]
        %v211 = vld [vmem:[%s177 + $0x10] sm:$0xf]
        %v212 = vld [vmem:[%s177 + $0x14] sm:$0xf]
        %v213 = vld [vmem:[%s177 + $0x18] sm:$0xf]
        %v214 = vld [vmem:[%s177 + $0x1c] sm:$0xf]
        %v215 = vld [vmem:[%s177 + $0x20] sm:$0xf]
        %v216 = vld [vmem:[%s177 + $0x24] sm:$0xf]
        %v217 = vld [vmem:[%s177 + $0x28] sm:$0xf]
        %v218 = vld [vmem:[%s177 + $0x2c] sm:$0xf]
        %v219 = vld [vmem:[%s177 + $0x30] sm:$0xf]
        %v220 = vld [vmem:[%s177 + $0x34] sm:$0xf]
        %v221 = vld [vmem:[%s177 + $0x38] sm:$0xf]
        %v222 = vld [vmem:[%s177 + $0x3c] sm:$0xf]
        %v223 = vld [vmem:[%s177 + $0x40] sm:$0xf]
        %v224 = vld [vmem:[%s177 + $0x44] sm:$0xf]
        %v225 = vld [vmem:[%s177 + $0x48] sm:$0xf]
        %v226 = vld [vmem:[%s177 + $0x4c] sm:$0xf]
        %v227 = vld [vmem:[%s177 + $0x50] sm:$0xf]
        %v228 = vld [vmem:[%s177 + $0x54] sm:$0xf]
        %v229 = vld [vmem:[%s177 + $0x58] sm:$0xf]
        %v230 = vld [vmem:[%s177 + $0x5c] sm:$0xf]
        %v231 = vld [vmem:[%s177 + $0x60] sm:$0xf]
        %v232 = vld [vmem:[%s177 + $0x64] sm:$0xf]
        %v233 = vld [vmem:[%s177 + $0x68] sm:$0xf]
        %v234 = vld [vmem:[%s177 + $0x6c] sm:$0xf]
        %v235 = vld [vmem:[%s177 + $0x70] sm:$0xf]
        %v236 = vld [vmem:[%s177 + $0x74] sm:$0xf]
        %v237 = vld [vmem:[%s177 + $0x78] sm:$0xf]
        %v238 = vld [vmem:[%s177 + $0x7c] sm:$0xf]
        %v239 = vld [vmem:[#allocation5] sm:$0xf]
        %v240 = vld [vmem:[#allocation5 + $0x4] sm:$0xf]
        %v241 = vld [vmem:[#allocation5 + $0x8] sm:$0xf]
        %v242 = vld [vmem:[#allocation5 + $0xc] sm:$0xf]
        %v243 = vld [vmem:[#allocation5 + $0x10] sm:$0xf]
        %v244 = vld [vmem:[#allocation5 + $0x14] sm:$0xf]
        %v245 = vld [vmem:[#allocation5 + $0x18] sm:$0xf]
        %v246 = vld [vmem:[#allocation5 + $0x1c] sm:$0xf]
        %v247 = vld [vmem:[#allocation5 + $0x20] sm:$0xf]
        %v248 = vld [vmem:[#allocation5 + $0x24] sm:$0xf]
        %v249 = vld [vmem:[#allocation5 + $0x28] sm:$0xf]
        %v250 = vld [vmem:[#allocation5 + $0x2c] sm:$0xf]
        %v251 = vld [vmem:[#allocation5 + $0x30] sm:$0xf]
        %v252 = vld [vmem:[#allocation5 + $0x34] sm:$0xf]
        %v253 = vld [vmem:[#allocation5 + $0x38] sm:$0xf]
        %v254 = vld [vmem:[#allocation5 + $0x3c] sm:$0xf]
        %v255 = vld [vmem:[%s2] sm:$0x1]
        %v257 = vlaneseq
        %v258 = vshrl.u32 %v257, 7
        %v259 = vsub.s32 0, %v258
        %v260 = vrot.slane %v255, %v259
        %v294 = vunpack.c.l.b16 %v207
        %v295 = vunpack.c.l.b16 %v208
        %v296 = vunpack.c.l.b16 %v209
        %v297 = vunpack.c.l.b16 %v210
        %v298 = vunpack.c.l.b16 %v211
        %v299 = vunpack.c.l.b16 %v212
        %v300 = vunpack.c.l.b16 %v213
        %v301 = vunpack.c.l.b16 %v214
        %v302 = vunpack.c.l.b16 %v215
        %v303 = vunpack.c.l.b16 %v216
        %v304 = vunpack.c.l.b16 %v217
        %v305 = vunpack.c.l.b16 %v218
        %v306 = vunpack.c.l.b16 %v219
        %v307 = vunpack.c.l.b16 %v220
        %v308 = vunpack.c.l.b16 %v221
        %v309 = vunpack.c.l.b16 %v222
        %v310 = vunpack.c.l.b16 %v223
        %v311 = vunpack.c.l.b16 %v224
        %v312 = vunpack.c.l.b16 %v225
        %v313 = vunpack.c.l.b16 %v226
        %v314 = vunpack.c.l.b16 %v227
        %v315 = vunpack.c.l.b16 %v228
        %v316 = vunpack.c.l.b16 %v229
        %v317 = vunpack.c.l.b16 %v230
        %v318 = vunpack.c.l.b16 %v231
        %v319 = vunpack.c.l.b16 %v232
        %v320 = vunpack.c.l.b16 %v233
        %v321 = vunpack.c.l.b16 %v234
        %v322 = vunpack.c.l.b16 %v235
        %v323 = vunpack.c.l.b16 %v236
        %v324 = vunpack.c.l.b16 %v237
        %v325 = vunpack.c.l.b16 %v238
        %v326 = vpack.c.b16 %v295, %v294
        %v327 = vpack.c.b16 %v297, %v296
        %v328 = vpack.c.b16 %v299, %v298
        %v329 = vpack.c.b16 %v301, %v300
        %v330 = vpack.c.b16 %v303, %v302
        %v331 = vpack.c.b16 %v305, %v304
        %v332 = vpack.c.b16 %v307, %v306
        %v333 = vpack.c.b16 %v309, %v308
        %v334 = vpack.c.b16 %v311, %v310
        %v335 = vpack.c.b16 %v313, %v312
        %v336 = vpack.c.b16 %v315, %v314
        %v337 = vpack.c.b16 %v317, %v316
        %v338 = vpack.c.b16 %v319, %v318
        %v339 = vpack.c.b16 %v321, %v320
        %v340 = vpack.c.b16 %v323, %v322
        %v341 = vpack.c.b16 %v325, %v324
        %v374 = vunpack.c.l.b16 %v239
        %v375 = vunpack.c.l.b16 %v240
        %v376 = vunpack.c.l.b16 %v241
        %v377 = vunpack.c.l.b16 %v242
        %v378 = vunpack.c.l.b16 %v243
        %v379 = vunpack.c.l.b16 %v244
        %v380 = vunpack.c.l.b16 %v245
        %v381 = vunpack.c.l.b16 %v246
        %v382 = vunpack.c.l.b16 %v247
        %v383 = vunpack.c.l.b16 %v248
        %v384 = vunpack.c.l.b16 %v249
        %v385 = vunpack.c.l.b16 %v250
        %v386 = vunpack.c.l.b16 %v251
        %v387 = vunpack.c.l.b16 %v252
        %v388 = vunpack.c.l.b16 %v253
        %v389 = vunpack.c.l.b16 %v254
        %v390 = vpack.c.b16 %v375, %v374
        %v391 = vpack.c.b16 %v377, %v376
        %v392 = vpack.c.b16 %v379, %v378
        %v393 = vpack.c.b16 %v381, %v380
        %v394 = vpack.c.b16 %v383, %v382
        %v395 = vpack.c.b16 %v385, %v384
        %v396 = vpack.c.b16 %v387, %v386
        %v397 = vpack.c.b16 %v389, %v388
        %406 = vmatprep.subr.bf16.mxu0 0
        %407 = vmatpush1.bf16.msra.mxu0 %v390
        %408 = vmatprep.subr.bf16.mxu0 0
        %409 = vmatpush1.bf16.msra.mxu0 %v391
        %410 = vmatprep.subr.bf16.mxu0 0
        %411 = vmatpush1.bf16.msra.mxu0 %v392
        %412 = vmatprep.subr.bf16.mxu0 0
        %413 = vmatpush1.bf16.msra.mxu0 %v393
        %414 = vmatprep.subr.bf16.mxu0 0
        %415 = vmatpush1.bf16.msra.mxu0 %v394
        %416 = vmatprep.subr.bf16.mxu0 0
        %417 = vmatpush1.bf16.msra.mxu0 %v395
        %418 = vmatprep.subr.bf16.mxu0 0
        %419 = vmatpush1.bf16.msra.mxu0 %v396
        %420 = vmatprep.subr.bf16.mxu0 0
        %421 = vmatpush1.bf16.msra.mxu0 %v397
        %422 = vmatprep.subr.bf16.mxu0 0
        %423 = vmatpush1.bf16.msra.mxu0 0
        %424 = vmatprep.subr.bf16.mxu0 0
        %425 = vmatpush1.bf16.msra.mxu0 0
        %426 = vmatprep.subr.bf16.mxu0 0
        %427 = vmatpush1.bf16.msra.mxu0 0
        %428 = vmatprep.subr.bf16.mxu0 0
        %429 = vmatpush1.bf16.msra.mxu0 0
        %430 = vmatprep.subr.bf16.mxu0 0
        %431 = vmatpush1.bf16.msra.mxu0 0
        %432 = vmatprep.subr.bf16.mxu0 0
        %433 = vmatpush1.bf16.msra.mxu0 0
        %434 = vmatprep.subr.bf16.mxu0 0
        %435 = vmatpush1.bf16.msra.mxu0 0
        %436 = vmatprep.subr.bf16.mxu0 0
        %437 = vmatpush1.bf16.msra.mxu0 0
        %438 = vmatprep.mubr.bf16.mxu0 0
        %439 = vmatmul.mubr.bf16.gmra.mrb[0].mxu0 %v326
        %v440 = vpop.f32.mrb[0].mxu0
        %v441 = vadd.f32 %v260, %v440
        %v442 = vpop.f32.mrb[0].mxu0
        %v443 = vpop.f32.mrb[0].mxu0
        %v444 = vadd.f32 %v260, %v443
        %v445 = vpop.f32.mrb[0].mxu0
        %446 = vmatprep.mubr.bf16.mxu0 0
        %447 = vmatmul.mubr.bf16.gmra.mrb[0].mxu0 %v327
        %v448 = vpop.f32.mrb[0].mxu0
        %v449 = vadd.f32 %v260, %v448
        %v450 = vpop.f32.mrb[0].mxu0
        %v451 = vpop.f32.mrb[0].mxu0
        %v452 = vadd.f32 %v260, %v451
        %v453 = vpop.f32.mrb[0].mxu0
        %454 = vmatprep.mubr.bf16.mxu0 0
        %455 = vmatmul.mubr.bf16.gmra.mrb[0].mxu0 %v328
        %v456 = vpop.f32.mrb[0].mxu0
        %v457 = vadd.f32 %v260, %v456
        %v458 = vpop.f32.mrb[0].mxu0
        %v459 = vpop.f32.mrb[0].mxu0
        %v460 = vadd.f32 %v260, %v459
        %v461 = vpop.f32.mrb[0].mxu0
        %462 = vmatprep.mubr.bf16.mxu0 0
        %463 = vmatmul.mubr.bf16.gmra.mrb[0].mxu0 %v329
        %v464 = vpop.f32.mrb[0].mxu0
        %v465 = vadd.f32 %v260, %v464
        %v466 = vpop.f32.mrb[0].mxu0
        %v467 = vpop.f32.mrb[0].mxu0
        %v468 = vadd.f32 %v260, %v467
        %v469 = vpop.f32.mrb[0].mxu0
        %470 = vmatprep.mubr.bf16.mxu0 0
        %471 = vmatmul.mubr.bf16.gmra.mrb[0].mxu0 %v330
        %v472 = vpop.f32.mrb[0].mxu0
        %v473 = vadd.f32 %v260, %v472
        %v474 = vpop.f32.mrb[0].mxu0
        %v475 = vpop.f32.mrb[0].mxu0
        %v476 = vadd.f32 %v260, %v475
        %v477 = vpop.f32.mrb[0].mxu0
        %478 = vmatprep.mubr.bf16.mxu0 0
        %479 = vmatmul.mubr.bf16.gmra.mrb[0].mxu0 %v331
        %v480 = vpop.f32.mrb[0].mxu0
        %v481 = vadd.f32 %v260, %v480
        %v482 = vpop.f32.mrb[0].mxu0
        %v483 = vpop.f32.mrb[0].mxu0
        %v484 = vadd.f32 %v260, %v483
        %v485 = vpop.f32.mrb[0].mxu0
        %486 = vmatprep.mubr.bf16.mxu0 0
        %487 = vmatmul.mubr.bf16.gmra.mrb[0].mxu0 %v332
        %v488 = vpop.f32.mrb[0].mxu0
        %v489 = vadd.f32 %v260, %v488
        %v490 = vpop.f32.mrb[0].mxu0
        %v491 = vpop.f32.mrb[0].mxu0
        %v492 = vadd.f32 %v260, %v491
        %v493 = vpop.f32.mrb[0].mxu0
        %494 = vmatprep.mubr.bf16.mxu0 0
        %495 = vmatmul.mubr.bf16.gmra.mrb[0].mxu0 %v333
        %v496 = vpop.f32.mrb[0].mxu0
        %v497 = vadd.f32 %v260, %v496
        %v498 = vpop.f32.mrb[0].mxu0
        %v499 = vpop.f32.mrb[0].mxu0
        %v500 = vadd.f32 %v260, %v499
        %v501 = vpop.f32.mrb[0].mxu0
        %502 = vmatprep.mubr.bf16.mxu0 0
        %503 = vmatmul.mubr.bf16.gmra.mrb[0].mxu0 %v334
        %v504 = vpop.f32.mrb[0].mxu0
        %v505 = vadd.f32 %v260, %v504
        %v506 = vpop.f32.mrb[0].mxu0
        %v507 = vpop.f32.mrb[0].mxu0
        %v508 = vadd.f32 %v260, %v507
        %v509 = vpop.f32.mrb[0].mxu0
        %510 = vmatprep.mubr.bf16.mxu0 0
        %511 = vmatmul.mubr.bf16.gmra.mrb[0].mxu0 %v335
        %v512 = vpop.f32.mrb[0].mxu0
        %v513 = vadd.f32 %v260, %v512
        %v514 = vpop.f32.mrb[0].mxu0
        %v515 = vpop.f32.mrb[0].mxu0
        %v516 = vadd.f32 %v260, %v515
        %v517 = vpop.f32.mrb[0].mxu0
        %518 = vmatprep.mubr.bf16.mxu0 0
        %519 = vmatmul.mubr.bf16.gmra.mrb[0].mxu0 %v336
        %v520 = vpop.f32.mrb[0].mxu0
        %v521 = vadd.f32 %v260, %v520
        %v522 = vpop.f32.mrb[0].mxu0
        %v523 = vpop.f32.mrb[0].mxu0
        %v524 = vadd.f32 %v260, %v523
        %v525 = vpop.f32.mrb[0].mxu0
        %526 = vmatprep.mubr.bf16.mxu0 0
        %527 = vmatmul.mubr.bf16.gmra.mrb[0].mxu0 %v337
        %v528 = vpop.f32.mrb[0].mxu0
        %v529 = vadd.f32 %v260, %v528
        %v530 = vpop.f32.mrb[0].mxu0
        %v531 = vpop.f32.mrb[0].mxu0
        %v532 = vadd.f32 %v260, %v531
        %v533 = vpop.f32.mrb[0].mxu0
        %534 = vmatprep.mubr.bf16.mxu0 0
        %535 = vmatmul.mubr.bf16.gmra.mrb[0].mxu0 %v338
        %v536 = vpop.f32.mrb[0].mxu0
        %v537 = vadd.f32 %v260, %v536
        %v538 = vpop.f32.mrb[0].mxu0
        %v539 = vpop.f32.mrb[0].mxu0
        %v540 = vadd.f32 %v260, %v539
        %v541 = vpop.f32.mrb[0].mxu0
        %542 = vmatprep.mubr.bf16.mxu0 0
        %543 = vmatmul.mubr.bf16.gmra.mrb[0].mxu0 %v339
        %v544 = vpop.f32.mrb[0].mxu0
        %v545 = vadd.f32 %v260, %v544
        %v546 = vpop.f32.mrb[0].mxu0
        %v547 = vpop.f32.mrb[0].mxu0
        %v548 = vadd.f32 %v260, %v547
        %v549 = vpop.f32.mrb[0].mxu0
        %550 = vmatprep.mubr.bf16.mxu0 0
        %551 = vmatmul.mubr.bf16.gmra.mrb[0].mxu0 %v340
        %v552 = vpop.f32.mrb[0].mxu0
        %v553 = vadd.f32 %v260, %v552
        %v554 = vpop.f32.mrb[0].mxu0
        %v555 = vpop.f32.mrb[0].mxu0
        %v556 = vadd.f32 %v260, %v555
        %v557 = vpop.f32.mrb[0].mxu0
        %558 = vmatprep.mubr.bf16.mxu0 0
        %559 = vmatmul.mubr.bf16.gmra.mrb[0].mxu0 %v341
        %v560 = vpop.f32.mrb[0].mxu0
        %v561 = vadd.f32 %v260, %v560
        %v562 = vpop.f32.mrb[0].mxu0
        %v563 = vpop.f32.mrb[0].mxu0
        %v564 = vadd.f32 %v260, %v563
        %v565 = vpop.f32.mrb[0].mxu0
        %566 = vdwg.mxu0
        %v567 = vmax.f32 %v441, 0.0
        %v568 = vmax.f32 %v444, 0.0
        %v569 = vmax.f32 %v449, 0.0
        %v570 = vmax.f32 %v452, 0.0
        %v571 = vmax.f32 %v457, 0.0
        %v572 = vmax.f32 %v460, 0.0
        %v573 = vmax.f32 %v465, 0.0
        %v574 = vmax.f32 %v468, 0.0
        %v575 = vmax.f32 %v473, 0.0
        %v576 = vmax.f32 %v476, 0.0
        %v577 = vmax.f32 %v481, 0.0
        %v578 = vmax.f32 %v484, 0.0
        %v579 = vmax.f32 %v489, 0.0
        %v580 = vmax.f32 %v492, 0.0
        %v581 = vmax.f32 %v497, 0.0
        %v582 = vmax.f32 %v500, 0.0
        %v583 = vmax.f32 %v505, 0.0
        %v584 = vmax.f32 %v508, 0.0
        %v585 = vmax.f32 %v513, 0.0
        %v586 = vmax.f32 %v516, 0.0
        %v587 = vmax.f32 %v521, 0.0
        %v588 = vmax.f32 %v524, 0.0
        %v589 = vmax.f32 %v529, 0.0
        %v590 = vmax.f32 %v532, 0.0
        %v591 = vmax.f32 %v537, 0.0
        %v592 = vmax.f32 %v540, 0.0
        %v593 = vmax.f32 %v545, 0.0
        %v594 = vmax.f32 %v548, 0.0
        %v595 = vmax.f32 %v553, 0.0
        %v596 = vmax.f32 %v556, 0.0
        %v597 = vmax.f32 %v561, 0.0
        %v598 = vmax.f32 %v564, 0.0
        %v599 = vpack.c.bf16 %v568, %v567
        %v600 = vpack.c.bf16 %v570, %v569
        %v601 = vpack.c.bf16 %v572, %v571
        %v602 = vpack.c.bf16 %v574, %v573
        %v603 = vpack.c.bf16 %v576, %v575
        %v604 = vpack.c.bf16 %v578, %v577
        %v605 = vpack.c.bf16 %v580, %v579
        %v606 = vpack.c.bf16 %v582, %v581
        %v607 = vpack.c.bf16 %v584, %v583
        %v608 = vpack.c.bf16 %v586, %v585
        %v609 = vpack.c.bf16 %v588, %v587
        %v610 = vpack.c.bf16 %v590, %v589
        %v611 = vpack.c.bf16 %v592, %v591
        %v612 = vpack.c.bf16 %v594, %v593
        %v613 = vpack.c.bf16 %v596, %v595
        %v614 = vpack.c.bf16 %v598, %v597
        %v631 = vunpack.c.l.b16 %v599
        %v632 = vunpack.c.h.b16 %v599
        %v633 = vunpack.c.l.b16 %v600
        %v634 = vunpack.c.h.b16 %v600
        %v635 = vunpack.c.l.b16 %v601
        %v636 = vunpack.c.h.b16 %v601
        %v637 = vunpack.c.l.b16 %v602
        %v638 = vunpack.c.h.b16 %v602
        %v639 = vunpack.c.l.b16 %v603
        %v640 = vunpack.c.h.b16 %v603
        %v641 = vunpack.c.l.b16 %v604
        %v642 = vunpack.c.h.b16 %v604
        %v643 = vunpack.c.l.b16 %v605
        %v644 = vunpack.c.h.b16 %v605
        %v645 = vunpack.c.l.b16 %v606
        %v646 = vunpack.c.h.b16 %v606
        %v647 = vunpack.c.l.b16 %v607
        %v648 = vunpack.c.h.b16 %v607
        %v649 = vunpack.c.l.b16 %v608
        %v650 = vunpack.c.h.b16 %v608
        %v651 = vunpack.c.l.b16 %v609
        %v652 = vunpack.c.h.b16 %v609
        %v653 = vunpack.c.l.b16 %v610
        %v654 = vunpack.c.h.b16 %v610
        %v655 = vunpack.c.l.b16 %v611
        %v656 = vunpack.c.h.b16 %v611
        %v657 = vunpack.c.l.b16 %v612
        %v658 = vunpack.c.h.b16 %v612
        %v659 = vunpack.c.l.b16 %v613
        %v660 = vunpack.c.h.b16 %v613
        %v661 = vunpack.c.l.b16 %v614
        %v662 = vunpack.c.h.b16 %v614
        %v663 = vpack.c.b16 %v631, %v631
        %v664 = vpack.c.b16 %v632, %v632
        %v665 = vpack.c.b16 %v633, %v633
        %v666 = vpack.c.b16 %v634, %v634
        %v667 = vpack.c.b16 %v635, %v635
        %v668 = vpack.c.b16 %v636, %v636
        %v669 = vpack.c.b16 %v637, %v637
        %v670 = vpack.c.b16 %v638, %v638
        %v671 = vpack.c.b16 %v639, %v639
        %v672 = vpack.c.b16 %v640, %v640
        %v673 = vpack.c.b16 %v641, %v641
        %v674 = vpack.c.b16 %v642, %v642
        %v675 = vpack.c.b16 %v643, %v643
        %v676 = vpack.c.b16 %v644, %v644
        %v677 = vpack.c.b16 %v645, %v645
        %v678 = vpack.c.b16 %v646, %v646
        %v679 = vpack.c.b16 %v647, %v647
        %v680 = vpack.c.b16 %v648, %v648
        %v681 = vpack.c.b16 %v649, %v649
        %v682 = vpack.c.b16 %v650, %v650
        %v683 = vpack.c.b16 %v651, %v651
        %v684 = vpack.c.b16 %v652, %v652
        %v685 = vpack.c.b16 %v653, %v653
        %v686 = vpack.c.b16 %v654, %v654
        %v687 = vpack.c.b16 %v655, %v655
        %v688 = vpack.c.b16 %v656, %v656
        %v689 = vpack.c.b16 %v657, %v657
        %v690 = vpack.c.b16 %v658, %v658
        %v691 = vpack.c.b16 %v659, %v659
        %v692 = vpack.c.b16 %v660, %v660
        %v693 = vpack.c.b16 %v661, %v661
        %v694 = vpack.c.b16 %v662, %v662
        %727 = vst [vmem:[%s203] sm:$0xf] %v663
        %728 = vst [vmem:[%s203 + $0x4] sm:$0xf] %v664
        %729 = vst [vmem:[%s203 + $0x8] sm:$0xf] %v665
        %730 = vst [vmem:[%s203 + $0xc] sm:$0xf] %v666
        %731 = vst [vmem:[%s203 + $0x10] sm:$0xf] %v667
        %732 = vst [vmem:[%s203 + $0x14] sm:$0xf] %v668
        %733 = vst [vmem:[%s203 + $0x18] sm:$0xf] %v669
        %734 = vst [vmem:[%s203 + $0x1c] sm:$0xf] %v670
        %735 = vst [vmem:[%s203 + $0x20] sm:$0xf] %v671
        %736 = vst [vmem:[%s203 + $0x24] sm:$0xf] %v672
        %737 = vst [vmem:[%s203 + $0x28] sm:$0xf] %v673
        %738 = vst [vmem:[%s203 + $0x2c] sm:$0xf] %v674
        %739 = vst [vmem:[%s203 + $0x30] sm:$0xf] %v675
        %740 = vst [vmem:[%s203 + $0x34] sm:$0xf] %v676
        %741 = vst [vmem:[%s203 + $0x38] sm:$0xf] %v677
        %742 = vst [vmem:[%s203 + $0x3c] sm:$0xf] %v678
        %743 = vst [vmem:[%s203 + $0x40] sm:$0xf] %v679
        %744 = vst [vmem:[%s203 + $0x44] sm:$0xf] %v680
        %745 = vst [vmem:[%s203 + $0x48] sm:$0xf] %v681
        %746 = vst [vmem:[%s203 + $0x4c] sm:$0xf] %v682
        %747 = vst [vmem:[%s203 + $0x50] sm:$0xf] %v683
        %748 = vst [vmem:[%s203 + $0x54] sm:$0xf] %v684
        %749 = vst [vmem:[%s203 + $0x58] sm:$0xf] %v685
        %750 = vst [vmem:[%s203 + $0x5c] sm:$0xf] %v686
        %751 = vst [vmem:[%s203 + $0x60] sm:$0xf] %v687
        %752 = vst [vmem:[%s203 + $0x64] sm:$0xf] %v688
        %753 = vst [vmem:[%s203 + $0x68] sm:$0xf] %v689
        %754 = vst [vmem:[%s203 + $0x6c] sm:$0xf] %v690
        %755 = vst [vmem:[%s203 + $0x70] sm:$0xf] %v691
        %756 = vst [vmem:[%s203 + $0x74] sm:$0xf] %v692
        %757 = vst [vmem:[%s203 + $0x78] sm:$0xf] %v693
        %758 = vst [vmem:[%s203 + $0x7c] sm:$0xf] %v694
        %s759 = sand.u32 %s97, 1
        %s760 = scalar_lea.sflag [#allocation4], %s759
        %s761 = sand.u32 %s97, 1
        %s762 = smul.addr %s761, 128
        %s763 = scalar_lea.vmem [#allocation7], %s762
        // Predicated region
        $region41: #{tpu_custom_call.1} parent=31 // pred_check
          %p764 = pneg %p107
        $region42: #{tpu_custom_call.1} parent=31 // pred_check_branch
          %766 = sbr.rel (%p764) target = $region44
        $region43: #{tpu_custom_call.1} parent=31 // pred_region
          %s767 = smul.u32 32, %s21
          %s769 = ssub.s32 2048, 2048
          %770 = vsyncadd %s760, %s769
          %s771 = smul.addr %s767, 64
          %s772 = scalar_lea.hbm %s3, %s771
          %s773 = sshll.u32 %s763, 4
          %s774 = int_to_ptr.vmem [resolvable:$true] %s773
          %779 = dma.vmem_to_hbm [thread:$0]  %s774, 2048, %s772, %s760, 64, 64, 4
        $region44: #{tpu_custom_call.1} parent=31 // pred_fallthru
          _
      $region32: #{tpu_custom_call.1} parent=5 // pred_fallthru
        _
      %p780 = scmp.le.s32.totalorder 2, %s16
      // Predicated region
      $region45: #{tpu_custom_call.1} parent=5 // pred_check
        %p781 = pneg %p780
      $region46: #{tpu_custom_call.1} parent=5 // pred_check_branch
        %783 = sbr.rel (%p781) target = $region48
      $region47: #{tpu_custom_call.1} parent=5 // pred_region
        %s784 = ssub.s32 %s16, 2
        // Predicated region
        $region49: #{tpu_custom_call.1} parent=47 // pred_check
          %p785 = pneg %p113
        $region50: #{tpu_custom_call.1} parent=47 // pred_check_branch
          %787 = sbr.rel (%p785) target = $region52
        $region51: #{tpu_custom_call.1} parent=47 // pred_region
          %s788 = sand.u32 %s98, 1
          %s789 = scalar_lea.sflag [#allocation4], %s788
          %s790 = sand.u32 %s98, 1
          %s791 = smul.addr %s790, 128
          %s792 = scalar_lea.vmem [#allocation7], %s791
          %793 = dma.done %s789, 2048
        $region52: #{tpu_custom_call.1} parent=47 // pred_fallthru
          _
      $region48: #{tpu_custom_call.1} parent=5 // pred_fallthru
        _
    $region6: #{tpu_custom_call.1} parent=1 // loop_footer
      %s20 = sadd.s32 1, %s16
    $region7: #{tpu_custom_call.1} parent=1 // loop_footer_branch
      %15 = sbr.rel target = $region3
    $region8: #{tpu_custom_call.1} parent=1 // loop_exit
      _
    %794 = vsyncpa [#allocation3], 1
    %s795 = scalar_lea.sflag [#allocation3], 1
    %796 = vsyncpa %s795, 1
    %797 = vsyncpa [#allocation6], 1
    %798 = vsyncpa [#allocation4], 1
    %s799 = scalar_lea.sflag [#allocation4], 1
    %800 = vsyncpa %s799, 1

</llo_original>
